<compile_context>
chip_gen: v5e
topology: v5e:2x2
jax: 0.10.0
libtpu: 0.0.40
codegen_flags: <defaults>
</compile_context>

<pallas_src>
import functools

import jax
import jax.numpy as jnp
from jax.experimental import pallas as pl
from jax.experimental.pallas import tpu as pltpu


def _round_up(x, m):
    return (x + m - 1) // m * m


def _down_fused_kernel(xf_ref, pmask_ref, s_ref, w1_ref, b1_ref, imask_ref,
                       w2_ref, b2_ref, t_ref, o_ref,
                       xm_ref, pp_ref, y1_ref, xs1_ref, xs2_ref,
                       *, img_w, wpad, cin, cout):
    """Fused MaxPool(3,2,1) -> Conv3x3+ReLU -> Conv3x3+ReLU for one image."""
    NEG = -3.0e38
    n_in = xf_ref.shape[-1]            # lane-padded H*W
    n_pad = s_ref.shape[-1]            # lane-padded (Hp+2)*(Wp+2)
    mrg_x = img_w                      # maxpool shift margin
    mrg_p = wpad + 1                   # conv tap shift margin

    # Zero the shift scratches so out-of-window taps are finite zeros.
    pp_ref[...] = jnp.zeros(pp_ref.shape, jnp.float32)
    y1_ref[...] = jnp.zeros(y1_ref.shape, jnp.float32)
    xm_ref[...] = jnp.zeros(xm_ref.shape, jnp.float32)

    # ---------------- MaxPool2d(3, stride=2, padding=1) ----------------------
    xm_ref[:, mrg_x:mrg_x + n_in] = xf_ref[0].astype(jnp.float32)

    def nbr(delta, mask_row):
        # value[n] = plane[n + delta]; lanes without that neighbour -> NEG.
        val = xm_ref[:, mrg_x + delta:mrg_x + delta + n_in]
        return jnp.where(pmask_ref[mask_row:mask_row + 1, :] > 0.5, val, NEG)

    x0 = xm_ref[:, mrg_x:mrg_x + n_in]
    h = jnp.maximum(jnp.maximum(x0, nbr(-1, 0)), nbr(1, 1))         # horiz 3-max
    xm_ref[:, mrg_x:mrg_x + n_in] = h
    v = jnp.maximum(jnp.maximum(h, nbr(-img_w, 2)), nbr(img_w, 3))  # vert 3-max

    # Stride-2 subsample + scatter into the zero-padded flattened conv layout
    # (zero ring / zero lane tail come from the all-zero columns of S).
    pp = jnp.dot(v, s_ref[...], preferred_element_type=jnp.float32)  # (Cin, n_pad)
    pp_ref[:, mrg_p:mrg_p + n_pad] = pp

    # ---------------- conv1: 9 taps folded into one MXU matmul ---------------
    for t in range(9):
        off = (t // 3 - 1) * wpad + (t % 3 - 1)
        xs1_ref[t * cin:(t + 1) * cin, :] = \
            pp_ref[:, mrg_p + off:mrg_p + off + n_pad]
    acc1 = jnp.dot(w1_ref[...], xs1_ref[...].astype(jnp.bfloat16),
                   preferred_element_type=jnp.float32)               # (Cout, n_pad)
    # bias + ReLU, then force the pad ring/tail back to exact zeros for conv2.
    y1 = jnp.where(imask_ref[...] > 0.5,
                   jnp.maximum(acc1 + b1_ref[...], 0.0), 0.0)
    y1_ref[:, mrg_p:mrg_p + n_pad] = y1

    # ---------------- conv2 ----------------------------------------------------
    for t in range(9):
        off = (t // 3 - 1) * wpad + (t % 3 - 1)
        xs2_ref[t * cout:(t + 1) * cout, :] = \
            y1_ref[:, mrg_p + off:mrg_p + off + n_pad]
    acc2 = jnp.dot(w2_ref[...], xs2_ref[...].astype(jnp.bfloat16),
                   preferred_element_type=jnp.float32)               # (Cout, n_pad)

    # Interior extraction fused as one selection matmul; bias + ReLU; one store.
    out = jnp.dot(acc2, t_ref[...], preferred_element_type=jnp.float32)
    o_ref[0] = jnp.maximum(out + b2_ref[...], 0.0).astype(o_ref.dtype)


def down_forward(x, w1, b1, w2, b2):
    """Forward of `down` on NCHW inputs, as a single fused Pallas kernel."""
    B, Cin, H, W = x.shape
    Cout = w1.shape[0]
    Hp = (H - 1) // 2 + 1
    Wp = (W - 1) // 2 + 1
    Wpad = Wp + 2
    NHW = H * W
    NHW_al = _round_up(NHW, 128)
    Npad_al = _round_up((Hp + 2) * Wpad, 128)
    Nout = Hp * Wp

    # Lane-dense flattened input (free reshape; lane-pad only if needed).
    xf = x.reshape(B, Cin, NHW)
    if NHW_al != NHW:
        xf = jnp.pad(xf, ((0, 0), (0, 0), (0, NHW_al - NHW)))

    # Per-lane validity masks for the 4 maxpool neighbour shifts.
    n = jnp.arange(NHW_al)
    col, row, valid = n % W, n // W, n < NHW
    pmask = jnp.stack([valid & (col > 0), valid & (col < W - 1),
                       valid & (row > 0), valid & (row < H - 1)]
                      ).astype(jnp.float32)

    # 0/1 selection matrices: S = stride-2 subsample + scatter into the padded
    # conv layout; T = interior extraction of the final conv output.
    rr, cc = jnp.meshgrid(jnp.arange(Hp), jnp.arange(Wp), indexing="ij")
    src = (2 * rr * W + 2 * cc).reshape(-1)
    dst = ((rr + 1) * Wpad + (cc + 1)).reshape(-1)
    S = jnp.zeros((NHW_al, Npad_al), jnp.float32).at[src, dst].set(1.0)
    T = jnp.zeros((Npad_al, Nout), jnp.float32).at[dst, jnp.arange(Nout)].set(1.0)
    imask = jnp.sum(S, axis=0, keepdims=True)      # 1.0 on interior pixels

    # Weights packed tap-major / channel-minor as (Cout, 9*C), bf16 for the MXU
    # (accumulation stays f32 inside the kernel).
    w1p = jnp.transpose(w1, (0, 2, 3, 1)).reshape(Cout, 9 * Cin).astype(jnp.bfloat16)
    w2p = jnp.transpose(w2, (0, 2, 3, 1)).reshape(Cout, 9 * Cout).astype(jnp.bfloat16)
    b1c = b1.reshape(Cout, 1).astype(jnp.float32)
    b2c = b2.reshape(Cout, 1).astype(jnp.float32)

    kernel = functools.partial(_down_fused_kernel, img_w=W, wpad=Wpad,
                               cin=Cin, cout=Cout)
    out = pl.pallas_call(
        kernel,
        out_shape=jax.ShapeDtypeStruct((B, Cout, Nout), x.dtype),
        grid_spec=pltpu.PrefetchScalarGridSpec(
            num_scalar_prefetch=0,
            grid=(B,),
            in_specs=[
                pl.BlockSpec((1, Cin, NHW_al), lambda i: (i, 0, 0)),
                pl.BlockSpec((4, NHW_al), lambda i: (0, 0)),        # resident
                pl.BlockSpec((NHW_al, Npad_al), lambda i: (0, 0)),  # resident
                pl.BlockSpec((Cout, 9 * Cin), lambda i: (0, 0)),    # resident
                pl.BlockSpec((Cout, 1), lambda i: (0, 0)),          # resident
                pl.BlockSpec((1, Npad_al), lambda i: (0, 0)),       # resident
                pl.BlockSpec((Cout, 9 * Cout), lambda i: (0, 0)),   # resident
                pl.BlockSpec((Cout, 1), lambda i: (0, 0)),          # resident
                pl.BlockSpec((Npad_al, Nout), lambda i: (0, 0)),    # resident
            ],
            out_specs=pl.BlockSpec((1, Cout, Nout), lambda i: (i, 0, 0)),
            scratch_shapes=[
                pltpu.VMEM((Cin, NHW_al + 2 * W), jnp.float32),        # xm
                pltpu.VMEM((Cin, Npad_al + 2 * (Wpad + 1)), jnp.float32),   # pp
                pltpu.VMEM((Cout, Npad_al + 2 * (Wpad + 1)), jnp.float32),  # y1
                pltpu.VMEM((9 * Cin, Npad_al), jnp.float32),           # xs1
                pltpu.VMEM((9 * Cout, Npad_al), jnp.float32),          # xs2
            ],
        ),
        compiler_params=pltpu.CompilerParams(dimension_semantics=("parallel",)),
    )(xf, pmask, S, w1p, b1c, imask, w2p, b2c, T)
    return out.reshape(B, Cout, Hp, Wp)


if __name__ == "__main__":
    key = jax.random.PRNGKey(0)
    B, in_nc, out_nc, H, W = 2, 4, 8, 16, 16
    k_x, k_w1, k_b1, k_w2, k_b2 = jax.random.split(key, 5)

    x = jax.random.normal(k_x, (B, in_nc, H, W), dtype=jnp.float32)

    # PyTorch Conv2d default init: U(-k, k), k = 1/sqrt(fan_in)
    k1 = 1.0 / jnp.sqrt(in_nc * 9.0)
    w1 = jax.random.uniform(k_w1, (out_nc, in_nc, 3, 3), jnp.float32, -k1, k1)
    b1 = jax.random.uniform(k_b1, (out_nc,), jnp.float32, -k1, k1)
    k2 = 1.0 / jnp.sqrt(out_nc * 9.0)
    w2 = jax.random.uniform(k_w2, (out_nc, out_nc, 3, 3), jnp.float32, -k2, k2)
    b2 = jax.random.uniform(k_b2, (out_nc,), jnp.float32, -k2, k2)

    y = jax.jit(down_forward)(x, w1, b1, w2, b2)
    y = jax.block_until_ready(y)

    # Pure-JAX reference of the PyTorch forward.
    p = jax.lax.reduce_window(
        x, -jnp.inf, jax.lax.max,
        window_dimensions=(1, 1, 3, 3), window_strides=(1, 1, 2, 2),
        padding=((0, 0), (0, 0), (1, 1), (1, 1)))
    dn = ("NCHW", "OIHW", "NCHW")
    r = jax.lax.conv_general_dilated(p, w1, (1, 1), ((1, 1), (1, 1)),
                                     dimension_numbers=dn)
    r = jnp.maximum(r + b1[None, :, None, None], 0.0)
    r = jax.lax.conv_general_dilated(r, w2, (1, 1), ((1, 1), (1, 1)),
                                     dimension_numbers=dn)
    ref = jnp.maximum(r + b2[None, :, None, None], 0.0)

    assert y.shape == ref.shape == (B, out_nc, H // 2, W // 2)
    # Tolerance covers the bf16 MXU operands used for the two conv matmuls.
    assert jnp.allclose(y, ref, atol=3e-2, rtol=3e-2), "mismatch vs reference"
    print("KERNEL_OK")
</pallas_src>

<mosaic_0001>
module attributes {stable_mosaic.version = 11 : i64} {
  func.func @_down_fused_kernel(%arg0: i32, %arg1: memref<1x4x256xf32, #tpu.memory_space<vmem>>, %arg2: memref<4x256xf32, #tpu.memory_space<vmem>>, %arg3: memref<256x128xf32, #tpu.memory_space<vmem>>, %arg4: memref<8x36xbf16, #tpu.memory_space<vmem>>, %arg5: memref<8x1xf32, #tpu.memory_space<vmem>>, %arg6: memref<1x128xf32, #tpu.memory_space<vmem>>, %arg7: memref<8x72xbf16, #tpu.memory_space<vmem>>, %arg8: memref<8x1xf32, #tpu.memory_space<vmem>>, %arg9: memref<128x64xf32, #tpu.memory_space<vmem>>, %arg10: memref<1x8x64xf32, #tpu.memory_space<vmem>>, %arg11: memref<4x288xf32, #tpu.memory_space<vmem>>, %arg12: memref<4x150xf32, #tpu.memory_space<vmem>>, %arg13: memref<8x150xf32, #tpu.memory_space<vmem>>, %arg14: memref<36x128xf32, #tpu.memory_space<vmem>>, %arg15: memref<72x128xf32, #tpu.memory_space<vmem>>) attributes {dimension_semantics = [#tpu.dimension_semantics<parallel>], iteration_bounds = array<i64: 2>, scalar_prefetch = 0 : i64, scratch_operands = 5 : i64, tpu.core_type = #tpu.core_type<tc>, window_params = [{transform_indices = @transform_0, window_bounds = array<i64: 1, 4, 256>}, {pipeline_mode = #tpu.pipeline_mode<synchronous>, transform_indices = @transform_1, window_bounds = array<i64: 4, 256>}, {pipeline_mode = #tpu.pipeline_mode<synchronous>, transform_indices = @transform_2, window_bounds = array<i64: 256, 128>}, {pipeline_mode = #tpu.pipeline_mode<synchronous>, transform_indices = @transform_3, window_bounds = array<i64: 8, 36>}, {pipeline_mode = #tpu.pipeline_mode<synchronous>, transform_indices = @transform_4, window_bounds = array<i64: 8, 1>}, {pipeline_mode = #tpu.pipeline_mode<synchronous>, transform_indices = @transform_5, window_bounds = array<i64: 1, 128>}, {pipeline_mode = #tpu.pipeline_mode<synchronous>, transform_indices = @transform_6, window_bounds = array<i64: 8, 72>}, {pipeline_mode = #tpu.pipeline_mode<synchronous>, transform_indices = @transform_7, window_bounds = array<i64: 8, 1>}, {pipeline_mode = #tpu.pipeline_mode<synchronous>, transform_indices = @transform_8, window_bounds = array<i64: 128, 64>}, {transform_indices = @transform_9, window_bounds = array<i64: 1, 8, 64>}]} {
    %cst = arith.constant 0.000000e+00 : f32
    %0 = vector.broadcast %cst : f32 to vector<4x150xf32>
    %c0 = arith.constant 0 : index
    %c0_0 = arith.constant 0 : index
    %1 = vector.load %arg12[%c0, %c0_0] : memref<4x150xf32, #tpu.memory_space<vmem>>, vector<4x150xf32>
    tpu.vector_store %arg12[%c0, %c0_0], %0 {strides = array<i32>} : memref<4x150xf32, #tpu.memory_space<vmem>>, vector<4x150xf32>,
    %cst_1 = arith.constant 0.000000e+00 : f32
    %2 = vector.broadcast %cst_1 : f32 to vector<8x150xf32>
    %c0_2 = arith.constant 0 : index
    %c0_3 = arith.constant 0 : index
    %3 = vector.load %arg13[%c0_2, %c0_3] : memref<8x150xf32, #tpu.memory_space<vmem>>, vector<8x150xf32>
    tpu.vector_store %arg13[%c0_2, %c0_3], %2 {strides = array<i32>} : memref<8x150xf32, #tpu.memory_space<vmem>>, vector<8x150xf32>,
    %cst_4 = arith.constant 0.000000e+00 : f32
    %4 = vector.broadcast %cst_4 : f32 to vector<4x288xf32>
    %c0_5 = arith.constant 0 : index
    %c0_6 = arith.constant 0 : index
    %5 = vector.load %arg11[%c0_5, %c0_6] : memref<4x288xf32, #tpu.memory_space<vmem>>, vector<4x288xf32>
    tpu.vector_store %arg11[%c0_5, %c0_6], %4 {strides = array<i32>} : memref<4x288xf32, #tpu.memory_space<vmem>>, vector<4x288xf32>,
    %c0_7 = arith.constant 0 : index
    %c0_8 = arith.constant 0 : index
    %c0_9 = arith.constant 0 : index
    %6 = vector.load %arg1[%c0_7, %c0_8, %c0_9] : memref<1x4x256xf32, #tpu.memory_space<vmem>>, vector<1x4x256xf32>
    %7 = vector.shape_cast %6 : vector<1x4x256xf32> to vector<4x256xf32>
    %c0_10 = arith.constant 0 : index
    %c16 = arith.constant 16 : index
    %8 = vector.load %arg11[%c0_10, %c16] : memref<4x288xf32, #tpu.memory_space<vmem>>, vector<4x256xf32>
    tpu.vector_store %arg11[%c0_10, %c16], %7 {strides = array<i32>} : memref<4x288xf32, #tpu.memory_space<vmem>>, vector<4x256xf32>,
    %c0_11 = arith.constant 0 : index
    %c16_12 = arith.constant 16 : index
    %9 = vector.load %arg11[%c0_11, %c16_12] : memref<4x288xf32, #tpu.memory_space<vmem>>, vector<4x256xf32>
    %c0_13 = arith.constant 0 : index
    %c15 = arith.constant 15 : index
    %10 = vector.load %arg11[%c0_13, %c15] : memref<4x288xf32, #tpu.memory_space<vmem>>, vector<4x256xf32>
    %c0_14 = arith.constant 0 : index
    %c0_15 = arith.constant 0 : index
    %11 = vector.load %arg2[%c0_14, %c0_15] : memref<4x256xf32, #tpu.memory_space<vmem>>, vector<1x256xf32>
    %cst_16 = arith.constant 5.000000e-01 : f32
    %12 = vector.broadcast %cst_16 : f32 to vector<1x256xf32>
    %13 = arith.cmpf ogt, %11, %12 : vector<1x256xf32>
    %cst_17 = arith.constant -3.000000e+38 : f32
    %14 = vector.shape_cast %13 : vector<1x256xi1> to vector<1x256xi1>
    %15 = vector.broadcast %14 : vector<1x256xi1> to vector<4x256xi1>
    %16 = vector.broadcast %cst_17 : f32 to vector<4x256xf32>
    %17 = arith.select %15, %10, %16 : vector<4x256xi1>, vector<4x256xf32>
    %18 = arith.maximumf %9, %17 : vector<4x256xf32>
    %c0_18 = arith.constant 0 : index
    %c17 = arith.constant 17 : index
    %19 = vector.load %arg11[%c0_18, %c17] : memref<4x288xf32, #tpu.memory_space<vmem>>, vector<4x256xf32>
    %c1 = arith.constant 1 : index
    %c0_19 = arith.constant 0 : index
    %20 = vector.load %arg2[%c1, %c0_19] : memref<4x256xf32, #tpu.memory_space<vmem>>, vector<1x256xf32>
    %cst_20 = arith.constant 5.000000e-01 : f32
    %21 = vector.broadcast %cst_20 : f32 to vector<1x256xf32>
    %22 = arith.cmpf ogt, %20, %21 : vector<1x256xf32>
    %cst_21 = arith.constant -3.000000e+38 : f32
    %23 = vector.shape_cast %22 : vector<1x256xi1> to vector<1x256xi1>
    %24 = vector.broadcast %23 : vector<1x256xi1> to vector<4x256xi1>
    %25 = vector.broadcast %cst_21 : f32 to vector<4x256xf32>
    %26 = arith.select %24, %19, %25 : vector<4x256xi1>, vector<4x256xf32>
    %27 = arith.maximumf %18, %26 : vector<4x256xf32>
    %c0_22 = arith.constant 0 : index
    %c16_23 = arith.constant 16 : index
    %28 = vector.load %arg11[%c0_22, %c16_23] : memref<4x288xf32, #tpu.memory_space<vmem>>, vector<4x256xf32>
    tpu.vector_store %arg11[%c0_22, %c16_23], %27 {strides = array<i32>} : memref<4x288xf32, #tpu.memory_space<vmem>>, vector<4x256xf32>,
    %c0_24 = arith.constant 0 : index
    %c0_25 = arith.constant 0 : index
    %29 = vector.load %arg11[%c0_24, %c0_25] : memref<4x288xf32, #tpu.memory_space<vmem>>, vector<4x256xf32>
    %c2 = arith.constant 2 : index
    %c0_26 = arith.constant 0 : index
    %30 = vector.load %arg2[%c2, %c0_26] : memref<4x256xf32, #tpu.memory_space<vmem>>, vector<1x256xf32>
    %cst_27 = arith.constant 5.000000e-01 : f32
    %31 = vector.broadcast %cst_27 : f32 to vector<1x256xf32>
    %32 = arith.cmpf ogt, %30, %31 : vector<1x256xf32>
    %cst_28 = arith.constant -3.000000e+38 : f32
    %33 = vector.shape_cast %32 : vector<1x256xi1> to vector<1x256xi1>
    %34 = vector.broadcast %33 : vector<1x256xi1> to vector<4x256xi1>
    %35 = vector.broadcast %cst_28 : f32 to vector<4x256xf32>
    %36 = arith.select %34, %29, %35 : vector<4x256xi1>, vector<4x256xf32>
    %37 = arith.maximumf %27, %36 : vector<4x256xf32>
    %c0_29 = arith.constant 0 : index
    %c32 = arith.constant 32 : index
    %38 = vector.load %arg11[%c0_29, %c32] : memref<4x288xf32, #tpu.memory_space<vmem>>, vector<4x256xf32>
    %c3 = arith.constant 3 : index
    %c0_30 = arith.constant 0 : index
    %39 = vector.load %arg2[%c3, %c0_30] : memref<4x256xf32, #tpu.memory_space<vmem>>, vector<1x256xf32>
    %cst_31 = arith.constant 5.000000e-01 : f32
    %40 = vector.broadcast %cst_31 : f32 to vector<1x256xf32>
    %41 = arith.cmpf ogt, %39, %40 : vector<1x256xf32>
    %cst_32 = arith.constant -3.000000e+38 : f32
    %42 = vector.shape_cast %41 : vector<1x256xi1> to vector<1x256xi1>
    %43 = vector.broadcast %42 : vector<1x256xi1> to vector<4x256xi1>
    %44 = vector.broadcast %cst_32 : f32 to vector<4x256xf32>
    %45 = arith.select %43, %38, %44 : vector<4x256xi1>, vector<4x256xf32>
    %46 = arith.maximumf %37, %45 : vector<4x256xf32>
    %c0_33 = arith.constant 0 : index
    %c0_34 = arith.constant 0 : index
    %47 = vector.load %arg3[%c0_33, %c0_34] : memref<256x128xf32, #tpu.memory_space<vmem>>, vector<256x128xf32>
    %cst_35 = arith.constant dense<0.000000e+00> : vector<4x128xf32>
    %48 = tpu.matmul %46, %47, %cst_35 {dimension_numbers = #tpu.dot_dimension_numbers<[1], [0], [0], [1], [0, 0, 1, 1], [], []>} : vector<4x256xf32>, vector<256x128xf32>, vector<4x128xf32> -> vector<4x128xf32>
    %c0_36 = arith.constant 0 : index
    %c11 = arith.constant 11 : index
    %49 = vector.load %arg12[%c0_36, %c11] : memref<4x150xf32, #tpu.memory_space<vmem>>, vector<4x128xf32>
    tpu.vector_store %arg12[%c0_36, %c11], %48 {strides = array<i32>} : memref<4x150xf32, #tpu.memory_space<vmem>>, vector<4x128xf32>,
    %c0_37 = arith.constant 0 : index
    %c0_38 = arith.constant 0 : index
    %50 = vector.load %arg12[%c0_37, %c0_38] : memref<4x150xf32, #tpu.memory_space<vmem>>, vector<4x128xf32>
    %c0_39 = arith.constant 0 : index
    %c0_40 = arith.constant 0 : index
    %51 = vector.load %arg14[%c0_39, %c0_40] : memref<36x128xf32, #tpu.memory_space<vmem>>, vector<4x128xf32>
    tpu.vector_store %arg14[%c0_39, %c0_40], %50 {strides = array<i32>} : memref<36x128xf32, #tpu.memory_space<vmem>>, vector<4x128xf32>,
    %c0_41 = arith.constant 0 : index
    %c1_42 = arith.constant 1 : index
    %52 = vector.load %arg12[%c0_41, %c1_42] : memref<4x150xf32, #tpu.memory_space<vmem>>, vector<4x128xf32>
    %c4 = arith.constant 4 : index
    %c0_43 = arith.constant 0 : index
    %53 = vector.load %arg14[%c4, %c0_43] : memref<36x128xf32, #tpu.memory_space<vmem>>, vector<4x128xf32>
    tpu.vector_store %arg14[%c4, %c0_43], %52 {strides = array<i32>} : memref<36x128xf32, #tpu.memory_space<vmem>>, vector<4x128xf32>,
    %c0_44 = arith.constant 0 : index
    %c2_45 = arith.constant 2 : index
    %54 = vector.load %arg12[%c0_44, %c2_45] : memref<4x150xf32, #tpu.memory_space<vmem>>, vector<4x128xf32>
    %c8 = arith.constant 8 : index
    %c0_46 = arith.constant 0 : index
    %55 = vector.load %arg14[%c8, %c0_46] : memref<36x128xf32, #tpu.memory_space<vmem>>, vector<4x128xf32>
    tpu.vector_store %arg14[%c8, %c0_46], %54 {strides = array<i32>} : memref<36x128xf32, #tpu.memory_space<vmem>>, vector<4x128xf32>,
    %c0_47 = arith.constant 0 : index
    %c10 = arith.constant 10 : index
    %56 = vector.load %arg12[%c0_47, %c10] : memref<4x150xf32, #tpu.memory_space<vmem>>, vector<4x128xf32>
    %c12 = arith.constant 12 : index
    %c0_48 = arith.constant 0 : index
    %57 = vector.load %arg14[%c12, %c0_48] : memref<36x128xf32, #tpu.memory_space<vmem>>, vector<4x128xf32>
    tpu.vector_store %arg14[%c12, %c0_48], %56 {strides = array<i32>} : memref<36x128xf32, #tpu.memory_space<vmem>>, vector<4x128xf32>,
    %c0_49 = arith.constant 0 : index
    %c11_50 = arith.constant 11 : index
    %58 = vector.load %arg12[%c0_49, %c11_50] : memref<4x150xf32, #tpu.memory_space<vmem>>, vector<4x128xf32>
    %c16_51 = arith.constant 16 : index
    %c0_52 = arith.constant 0 : index
    %59 = vector.load %arg14[%c16_51, %c0_52] : memref<36x128xf32, #tpu.memory_space<vmem>>, vector<4x128xf32>
    tpu.vector_store %arg14[%c16_51, %c0_52], %58 {strides = array<i32>} : memref<36x128xf32, #tpu.memory_space<vmem>>, vector<4x128xf32>,
    %c0_53 = arith.constant 0 : index
    %c12_54 = arith.constant 12 : index
    %60 = vector.load %arg12[%c0_53, %c12_54] : memref<4x150xf32, #tpu.memory_space<vmem>>, vector<4x128xf32>
    %c20 = arith.constant 20 : index
    %c0_55 = arith.constant 0 : index
    %61 = vector.load %arg14[%c20, %c0_55] : memref<36x128xf32, #tpu.memory_space<vmem>>, vector<4x128xf32>
    tpu.vector_store %arg14[%c20, %c0_55], %60 {strides = array<i32>} : memref<36x128xf32, #tpu.memory_space<vmem>>, vector<4x128xf32>,
    %c0_56 = arith.constant 0 : index
    %c20_57 = arith.constant 20 : index
    %62 = vector.load %arg12[%c0_56, %c20_57] : memref<4x150xf32, #tpu.memory_space<vmem>>, vector<4x128xf32>
    %c24 = arith.constant 24 : index
    %c0_58 = arith.constant 0 : index
    %63 = vector.load %arg14[%c24, %c0_58] : memref<36x128xf32, #tpu.memory_space<vmem>>, vector<4x128xf32>
    tpu.vector_store %arg14[%c24, %c0_58], %62 {strides = array<i32>} : memref<36x128xf32, #tpu.memory_space<vmem>>, vector<4x128xf32>,
    %c0_59 = arith.constant 0 : index
    %c21 = arith.constant 21 : index
    %64 = vector.load %arg12[%c0_59, %c21] : memref<4x150xf32, #tpu.memory_space<vmem>>, vector<4x128xf32>
    %c28 = arith.constant 28 : index
    %c0_60 = arith.constant 0 : index
    %65 = vector.load %arg14[%c28, %c0_60] : memref<36x128xf32, #tpu.memory_space<vmem>>, vector<4x128xf32>
    tpu.vector_store %arg14[%c28, %c0_60], %64 {strides = array<i32>} : memref<36x128xf32, #tpu.memory_space<vmem>>, vector<4x128xf32>,
    %c0_61 = arith.constant 0 : index
    %c22 = arith.constant 22 : index
    %66 = vector.load %arg12[%c0_61, %c22] : memref<4x150xf32, #tpu.memory_space<vmem>>, vector<4x128xf32>
    %c32_62 = arith.constant 32 : index
    %c0_63 = arith.constant 0 : index
    %67 = vector.load %arg14[%c32_62, %c0_63] : memref<36x128xf32, #tpu.memory_space<vmem>>, vector<4x128xf32>
    tpu.vector_store %arg14[%c32_62, %c0_63], %66 {strides = array<i32>} : memref<36x128xf32, #tpu.memory_space<vmem>>, vector<4x128xf32>,
    %c0_64 = arith.constant 0 : index
    %c0_65 = arith.constant 0 : index
    %68 = vector.load %arg4[%c0_64, %c0_65] : memref<8x36xbf16, #tpu.memory_space<vmem>>, vector<8x36xbf16>
    %c0_66 = arith.constant 0 : index
    %c0_67 = arith.constant 0 : index
    %69 = vector.load %arg14[%c0_66, %c0_67] : memref<36x128xf32, #tpu.memory_space<vmem>>, vector<36x128xf32>
    %70 = arith.truncf %69 : vector<36x128xf32> to vector<36x128xbf16>
    %cst_68 = arith.constant dense<0.000000e+00> : vector<8x128xf32>
    %71 = tpu.matmul %68, %70, %cst_68 {dimension_numbers = #tpu.dot_dimension_numbers<[1], [0], [0], [1], [0, 0, 1, 1], [], []>} : vector<8x36xbf16>, vector<36x128xbf16>, vector<8x128xf32> -> vector<8x128xf32>
    %c0_69 = arith.constant 0 : index
    %c0_70 = arith.constant 0 : index
    %72 = vector.load %arg6[%c0_69, %c0_70] : memref<1x128xf32, #tpu.memory_space<vmem>>, vector<1x128xf32>
    %cst_71 = arith.constant 5.000000e-01 : f32
    %73 = vector.broadcast %cst_71 : f32 to vector<1x128xf32>
    %74 = arith.cmpf ogt, %72, %73 : vector<1x128xf32>
    %c0_72 = arith.constant 0 : index
    %c0_73 = arith.constant 0 : index
    %75 = vector.load %arg5[%c0_72, %c0_73] : memref<8x1xf32, #tpu.memory_space<vmem>>, vector<8x1xf32>
    %76 = vector.broadcast %75 : vector<8x1xf32> to vector<8x128xf32>
    %77 = arith.addf %71, %76 : vector<8x128xf32>
    %cst_74 = arith.constant 0.000000e+00 : f32
    %78 = vector.broadcast %cst_74 : f32 to vector<8x128xf32>
    %79 = arith.maximumf %77, %78 : vector<8x128xf32>
    %cst_75 = arith.constant 0.000000e+00 : f32
    %80 = vector.shape_cast %74 : vector<1x128xi1> to vector<1x128xi1>
    %81 = vector.broadcast %80 : vector<1x128xi1> to vector<8x128xi1>
    %82 = vector.broadcast %cst_75 : f32 to vector<8x128xf32>
    %83 = arith.select %81, %79, %82 : vector<8x128xi1>, vector<8x128xf32>
    %c0_76 = arith.constant 0 : index
    %c11_77 = arith.constant 11 : index
    %84 = vector.load %arg13[%c0_76, %c11_77] : memref<8x150xf32, #tpu.memory_space<vmem>>, vector<8x128xf32>
    tpu.vector_store %arg13[%c0_76, %c11_77], %83 {strides = array<i32>} : memref<8x150xf32, #tpu.memory_space<vmem>>, vector<8x128xf32>,
    %c0_78 = arith.constant 0 : index
    %c0_79 = arith.constant 0 : index
    %85 = vector.load %arg13[%c0_78, %c0_79] : memref<8x150xf32, #tpu.memory_space<vmem>>, vector<8x128xf32>
    %c0_80 = arith.constant 0 : index
    %c0_81 = arith.constant 0 : index
    %86 = vector.load %arg15[%c0_80, %c0_81] : memref<72x128xf32, #tpu.memory_space<vmem>>, vector<8x128xf32>
    tpu.vector_store %arg15[%c0_80, %c0_81], %85 {strides = array<i32>} : memref<72x128xf32, #tpu.memory_space<vmem>>, vector<8x128xf32>,
    %c0_82 = arith.constant 0 : index
    %c1_83 = arith.constant 1 : index
    %87 = vector.load %arg13[%c0_82, %c1_83] : memref<8x150xf32, #tpu.memory_space<vmem>>, vector<8x128xf32>
    %c8_84 = arith.constant 8 : index
    %c0_85 = arith.constant 0 : index
    %88 = vector.load %arg15[%c8_84, %c0_85] : memref<72x128xf32, #tpu.memory_space<vmem>>, vector<8x128xf32>
    tpu.vector_store %arg15[%c8_84, %c0_85], %87 {strides = array<i32>} : memref<72x128xf32, #tpu.memory_space<vmem>>, vector<8x128xf32>,
    %c0_86 = arith.constant 0 : index
    %c2_87 = arith.constant 2 : index
    %89 = vector.load %arg13[%c0_86, %c2_87] : memref<8x150xf32, #tpu.memory_space<vmem>>, vector<8x128xf32>
    %c16_88 = arith.constant 16 : index
    %c0_89 = arith.constant 0 : index
    %90 = vector.load %arg15[%c16_88, %c0_89] : memref<72x128xf32, #tpu.memory_space<vmem>>, vector<8x128xf32>
    tpu.vector_store %arg15[%c16_88, %c0_89], %89 {strides = array<i32>} : memref<72x128xf32, #tpu.memory_space<vmem>>, vector<8x128xf32>,
    %c0_90 = arith.constant 0 : index
    %c10_91 = arith.constant 10 : index
    %91 = vector.load %arg13[%c0_90, %c10_91] : memref<8x150xf32, #tpu.memory_space<vmem>>, vector<8x128xf32>
    %c24_92 = arith.constant 24 : index
    %c0_93 = arith.constant 0 : index
    %92 = vector.load %arg15[%c24_92, %c0_93] : memref<72x128xf32, #tpu.memory_space<vmem>>, vector<8x128xf32>
    tpu.vector_store %arg15[%c24_92, %c0_93], %91 {strides = array<i32>} : memref<72x128xf32, #tpu.memory_space<vmem>>, vector<8x128xf32>,
    %c0_94 = arith.constant 0 : index
    %c11_95 = arith.constant 11 : index
    %93 = vector.load %arg13[%c0_94, %c11_95] : memref<8x150xf32, #tpu.memory_space<vmem>>, vector<8x128xf32>
    %c32_96 = arith.constant 32 : index
    %c0_97 = arith.constant 0 : index
    %94 = vector.load %arg15[%c32_96, %c0_97] : memref<72x128xf32, #tpu.memory_space<vmem>>, vector<8x128xf32>
    tpu.vector_store %arg15[%c32_96, %c0_97], %93 {strides = array<i32>} : memref<72x128xf32, #tpu.memory_space<vmem>>, vector<8x128xf32>,
    %c0_98 = arith.constant 0 : index
    %c12_99 = arith.constant 12 : index
    %95 = vector.load %arg13[%c0_98, %c12_99] : memref<8x150xf32, #tpu.memory_space<vmem>>, vector<8x128xf32>
    %c40 = arith.constant 40 : index
    %c0_100 = arith.constant 0 : index
    %96 = vector.load %arg15[%c40, %c0_100] : memref<72x128xf32, #tpu.memory_space<vmem>>, vector<8x128xf32>
    tpu.vector_store %arg15[%c40, %c0_100], %95 {strides = array<i32>} : memref<72x128xf32, #tpu.memory_space<vmem>>, vector<8x128xf32>,
    %c0_101 = arith.constant 0 : index
    %c20_102 = arith.constant 20 : index
    %97 = vector.load %arg13[%c0_101, %c20_102] : memref<8x150xf32, #tpu.memory_space<vmem>>, vector<8x128xf32>
    %c48 = arith.constant 48 : index
    %c0_103 = arith.constant 0 : index
    %98 = vector.load %arg15[%c48, %c0_103] : memref<72x128xf32, #tpu.memory_space<vmem>>, vector<8x128xf32>
    tpu.vector_store %arg15[%c48, %c0_103], %97 {strides = array<i32>} : memref<72x128xf32, #tpu.memory_space<vmem>>, vector<8x128xf32>,
    %c0_104 = arith.constant 0 : index
    %c21_105 = arith.constant 21 : index
    %99 = vector.load %arg13[%c0_104, %c21_105] : memref<8x150xf32, #tpu.memory_space<vmem>>, vector<8x128xf32>
    %c56 = arith.constant 56 : index
    %c0_106 = arith.constant 0 : index
    %100 = vector.load %arg15[%c56, %c0_106] : memref<72x128xf32, #tpu.memory_space<vmem>>, vector<8x128xf32>
    tpu.vector_store %arg15[%c56, %c0_106], %99 {strides = array<i32>} : memref<72x128xf32, #tpu.memory_space<vmem>>, vector<8x128xf32>,
    %c0_107 = arith.constant 0 : index
    %c22_108 = arith.constant 22 : index
    %101 = vector.load %arg13[%c0_107, %c22_108] : memref<8x150xf32, #tpu.memory_space<vmem>>, vector<8x128xf32>
    %c64 = arith.constant 64 : index
    %c0_109 = arith.constant 0 : index
    %102 = vector.load %arg15[%c64, %c0_109] : memref<72x128xf32, #tpu.memory_space<vmem>>, vector<8x128xf32>
    tpu.vector_store %arg15[%c64, %c0_109], %101 {strides = array<i32>} : memref<72x128xf32, #tpu.memory_space<vmem>>, vector<8x128xf32>,
    %c0_110 = arith.constant 0 : index
    %c0_111 = arith.constant 0 : index
    %103 = vector.load %arg7[%c0_110, %c0_111] : memref<8x72xbf16, #tpu.memory_space<vmem>>, vector<8x72xbf16>
    %c0_112 = arith.constant 0 : index
    %c0_113 = arith.constant 0 : index
    %104 = vector.load %arg15[%c0_112, %c0_113] : memref<72x128xf32, #tpu.memory_space<vmem>>, vector<72x128xf32>
    %105 = arith.truncf %104 : vector<72x128xf32> to vector<72x128xbf16>
    %cst_114 = arith.constant dense<0.000000e+00> : vector<8x128xf32>
    %106 = tpu.matmul %103, %105, %cst_114 {dimension_numbers = #tpu.dot_dimension_numbers<[1], [0], [0], [1], [0, 0, 1, 1], [], []>} : vector<8x72xbf16>, vector<72x128xbf16>, vector<8x128xf32> -> vector<8x128xf32>
    %c0_115 = arith.constant 0 : index
    %c0_116 = arith.constant 0 : index
    %107 = vector.load %arg9[%c0_115, %c0_116] : memref<128x64xf32, #tpu.memory_space<vmem>>, vector<128x64xf32>
    %cst_117 = arith.constant dense<0.000000e+00> : vector<8x64xf32>
    %108 = tpu.matmul %106, %107, %cst_117 {dimension_numbers = #tpu.dot_dimension_numbers<[1], [0], [0], [1], [0, 0, 1, 1], [], []>} : vector<8x128xf32>, vector<128x64xf32>, vector<8x64xf32> -> vector<8x64xf32>
    %c0_118 = arith.constant 0 : index
    %c0_119 = arith.constant 0 : index
    %109 = vector.load %arg8[%c0_118, %c0_119] : memref<8x1xf32, #tpu.memory_space<vmem>>, vector<8x1xf32>
    %110 = vector.broadcast %109 : vector<8x1xf32> to vector<8x64xf32>
    %111 = arith.addf %108, %110 : vector<8x64xf32>
    %cst_120 = arith.constant 0.000000e+00 : f32
    %112 = vector.broadcast %cst_120 : f32 to vector<8x64xf32>
    %113 = arith.maximumf %111, %112 : vector<8x64xf32>
    %c0_121 = arith.constant 0 : index
    %c0_122 = arith.constant 0 : index
    %c0_123 = arith.constant 0 : index
    %114 = vector.load %arg10[%c0_121, %c0_122, %c0_123] : memref<1x8x64xf32, #tpu.memory_space<vmem>>, vector<1x8x64xf32>
    %115 = vector.shape_cast %114 : vector<1x8x64xf32> to vector<8x64xf32>
    %116 = vector.shape_cast %113 : vector<8x64xf32> to vector<1x8x64xf32>
    tpu.vector_store %arg10[%c0_121, %c0_122, %c0_123], %116 {strides = array<i32>} : memref<1x8x64xf32, #tpu.memory_space<vmem>>, vector<1x8x64xf32>,
    return
  }
  func.func @transform_0(%arg0: i32) -> (i32, i32, i32) {
    %c0_i32 = arith.constant 0 : i32
    %c0_i32_0 = arith.constant 0 : i32
    %c0_i32_1 = arith.constant 0 : i32
    return %arg0, %c0_i32, %c0_i32_0 : i32, i32, i32
  }
  func.func @transform_1(%arg0: i32) -> (i32, i32) {
    %c0_i32 = arith.constant 0 : i32
    %c0_i32_0 = arith.constant 0 : i32
    %c0_i32_1 = arith.constant 0 : i32
    return %c0_i32, %c0_i32_0 : i32, i32
  }
  func.func @transform_2(%arg0: i32) -> (i32, i32) {
    %c0_i32 = arith.constant 0 : i32
    %c0_i32_0 = arith.constant 0 : i32
    %c0_i32_1 = arith.constant 0 : i32
    return %c0_i32, %c0_i32_0 : i32, i32
  }
  func.func @transform_3(%arg0: i32) -> (i32, i32) {
    %c0_i32 = arith.constant 0 : i32
    %c0_i32_0 = arith.constant 0 : i32
    %c0_i32_1 = arith.constant 0 : i32
    return %c0_i32, %c0_i32_0 : i32, i32
  }
  func.func @transform_4(%arg0: i32) -> (i32, i32) {
    %c0_i32 = arith.constant 0 : i32
    %c0_i32_0 = arith.constant 0 : i32
    %c0_i32_1 = arith.constant 0 : i32
    return %c0_i32, %c0_i32_0 : i32, i32
  }
  func.func @transform_5(%arg0: i32) -> (i32, i32) {
    %c0_i32 = arith.constant 0 : i32
    %c0_i32_0 = arith.constant 0 : i32
    %c0_i32_1 = arith.constant 0 : i32
    return %c0_i32, %c0_i32_0 : i32, i32
  }
  func.func @transform_6(%arg0: i32) -> (i32, i32) {
    %c0_i32 = arith.constant 0 : i32
    %c0_i32_0 = arith.constant 0 : i32
    %c0_i32_1 = arith.constant 0 : i32
    return %c0_i32, %c0_i32_0 : i32, i32
  }
  func.func @transform_7(%arg0: i32) -> (i32, i32) {
    %c0_i32 = arith.constant 0 : i32
    %c0_i32_0 = arith.constant 0 : i32
    %c0_i32_1 = arith.constant 0 : i32
    return %c0_i32, %c0_i32_0 : i32, i32
  }
  func.func @transform_8(%arg0: i32) -> (i32, i32) {
    %c0_i32 = arith.constant 0 : i32
    %c0_i32_0 = arith.constant 0 : i32
    %c0_i32_1 = arith.constant 0 : i32
    return %c0_i32, %c0_i32_0 : i32, i32
  }
  func.func @transform_9(%arg0: i32) -> (i32, i32, i32) {
    %c0_i32 = arith.constant 0 : i32
    %c0_i32_0 = arith.constant 0 : i32
    %c0_i32_1 = arith.constant 0 : i32
    return %arg0, %c0_i32, %c0_i32_0 : i32, i32, i32
  }
}

</mosaic_0001>

<llo_original>
// kernel: down_forward.1
$region0: #{down_forward.1}
  #allocation0 [shape = 'u32[]', space=smem, size = 0x4, offset = 0x4, fixed_abs, tag = 'smem constant byte address 0x4 - core index']
  #allocation1 [shape = 'u32[72,128]{1,0:T(1,128)}', space=vmem, size = 0x9000, scoped, tag = 'internal scratch']
  #allocation2 [shape = 'f32[4,288]{1,0:T(4,128)}', space=vmem, size = 0x1800, scoped, tag = 'scratch operand']
  #allocation3 [shape = 'f32[4,150]{1,0:T(4,128)}', space=vmem, size = 0x1000, scoped, tag = 'scratch operand']
  #allocation4 [shape = 'f32[8,150]{1,0:T(8,128)}', space=vmem, size = 0x2000, scoped, tag = 'scratch operand']
  #allocation5 [shape = 'f32[36,128]{1,0:T(8,128)}', space=vmem, size = 0x5000, scoped, tag = 'scratch operand']
  #allocation6 [shape = 'f32[72,128]{1,0:T(8,128)}', space=vmem, size = 0x9000, scoped, tag = 'scratch operand']
  %s0 = inlined_call_operand.vmem [shape: f32[2,4,256], index: 0, kind: input, shape index: {}]
  %s1 = inlined_call_operand.vmem [shape: f32[4,256], index: 1, kind: input, shape index: {}]
  %s2 = inlined_call_operand.vmem [shape: f32[256,128], index: 2, kind: input, shape index: {}]
  %s3 = inlined_call_operand.vmem [shape: bf16[8,36], index: 3, kind: input, shape index: {}]
  %s4 = inlined_call_operand.vmem [shape: f32[8,1], index: 4, kind: input, shape index: {}]
  %s5 = inlined_call_operand.vmem [shape: f32[1,128], index: 5, kind: input, shape index: {}]
  %s6 = inlined_call_operand.vmem [shape: bf16[8,72], index: 6, kind: input, shape index: {}]
  %s7 = inlined_call_operand.vmem [shape: f32[8,1], index: 7, kind: input, shape index: {}]
  %s8 = inlined_call_operand.vmem [shape: f32[128,64], index: 8, kind: input, shape index: {}]
  %s9 = inlined_call_operand.vmem [shape: f32[2,8,64], index: 9, kind: output, shape index: {}]
  %s10 = sld [smem:[#allocation0]]
  $region69: #{down_forward.1} parent=0
    _
  %s12 = ssub.s32 1, %s10
  %s13 = scalar_select 0, %s12, %s10
  loop: start=0, step=1, limit=4
  $region2: #{down_forward.1} parent=0 // loop_pre_header
    _
  $region3: #{down_forward.1} parent=0 // loop_header
    %s15 = sphi 0, %s19
    %p16 = scmp.ge.s32.totalorder %s15, 4
    %s25 = sphi 0, %s27
    %s28 = sphi 0, %s25
    %s29 = sphi 0, %s28
    %s45 = sphi 0, %s29
    %s49 = sphi 0, %s49
    %s51 = sphi 0, %s49
    %s52 = sphi 0, %s51
    %s66 = sphi 0, %s52
    %s70 = sphi 0, %s70
    %s72 = sphi 0, %s70
    %s73 = sphi 0, %s72
    %s87 = sphi 0, %s73
    %s91 = sphi 0, %s91
    %s93 = sphi 0, %s91
    %s94 = sphi 0, %s93
    %s108 = sphi 0, %s94
    %s112 = sphi 0, %s112
    %s114 = sphi 0, %s112
    %s115 = sphi 0, %s114
    %s129 = sphi 0, %s115
    %s133 = sphi 0, %s133
    %s135 = sphi 0, %s133
    %s136 = sphi 0, %s135
    %s150 = sphi 0, %s136
    %s154 = sphi 0, %s154
    %s156 = sphi 0, %s154
    %s157 = sphi 0, %s156
    %s171 = sphi 0, %s157
    %s175 = sphi 0, %s175
    %s177 = sphi 0, %s175
    %s178 = sphi 0, %s177
    %s192 = sphi 0, %s178
    %s196 = sphi 0, %s196
    %s198 = sphi 0, %s196
    %s199 = sphi 0, %s198
    %s213 = sphi 0, %s199
    %s219 = sphi 0, %s221
    %s222 = sphi 0, %s219
    %s223 = sphi 0, %s222
    %s239 = sphi 0, %s223
  $region4: #{down_forward.1} parent=0 // loop_header_branch
    %18 = sbr.rel (%p16) target = $region8
  $region5: #{down_forward.1} parent=0 // loop_body
    %s20 = ssub.s32 %s15, 1
    %s21 = ssub.s32 %s15, 2
    %s22 = sadd.s32 %s15, 1
    %s23 = ssub.s32 %s15, %s22
    %p24 = scmp.eq.s32.totalorder %s23, 0
    %s26 = sadd.s32 %s25, 1
    %s27 = scalar_select %p24, %s25, %s26
    %p30 = pneg %p24
    %p31 = scmp.eq.s32.totalorder %s15, 1
    %p32 = por %p30, %p31
    %p33 = scmp.ne.s32.totalorder %s25, %s28
    %p34 = scmp.eq.s32.totalorder %s15, 0
    %p35 = por %p33, %p34
    %p36 = scmp.ne.s32.totalorder %s25, %s28
    %p37 = scmp.eq.s32.totalorder %s20, 1
    %p38 = por %p36, %p37
    %p39 = scmp.ne.s32.totalorder %s28, %s29
    %p40 = scmp.eq.s32.totalorder %s20, 0
    %p41 = por %p39, %p40
    %p42 = scmp.ne.s32.totalorder %s28, %s29
    %p43 = scmp.eq.s32.totalorder %s21, 1
    %p44 = por %p42, %p43
    %p46 = scmp.ne.s32.totalorder %s29, %s45
    %p47 = scmp.eq.s32.totalorder %s21, 0
    %p48 = por %p46, %p47
    %s50 = sadd.s32 %s49, 1
    %p53 = scmp.eq.s32.totalorder %s15, 1
    %p54 = scmp.ne.s32.totalorder %s49, %s51
    %p55 = scmp.eq.s32.totalorder %s15, 0
    %p56 = por %p54, %p55
    %p57 = scmp.ne.s32.totalorder %s49, %s51
    %p58 = scmp.eq.s32.totalorder %s20, 1
    %p59 = por %p57, %p58
    %p60 = scmp.ne.s32.totalorder %s51, %s52
    %p61 = scmp.eq.s32.totalorder %s20, 0
    %p62 = por %p60, %p61
    %p63 = scmp.ne.s32.totalorder %s51, %s52
    %p64 = scmp.eq.s32.totalorder %s21, 1
    %p65 = por %p63, %p64
    %p67 = scmp.ne.s32.totalorder %s52, %s66
    %p68 = scmp.eq.s32.totalorder %s21, 0
    %p69 = por %p67, %p68
    %s71 = sadd.s32 %s70, 1
    %p74 = scmp.eq.s32.totalorder %s15, 1
    %p75 = scmp.ne.s32.totalorder %s70, %s72
    %p76 = scmp.eq.s32.totalorder %s15, 0
    %p77 = por %p75, %p76
    %p78 = scmp.ne.s32.totalorder %s70, %s72
    %p79 = scmp.eq.s32.totalorder %s20, 1
    %p80 = por %p78, %p79
    %p81 = scmp.ne.s32.totalorder %s72, %s73
    %p82 = scmp.eq.s32.totalorder %s20, 0
    %p83 = por %p81, %p82
    %p84 = scmp.ne.s32.totalorder %s72, %s73
    %p85 = scmp.eq.s32.totalorder %s21, 1
    %p86 = por %p84, %p85
    %p88 = scmp.ne.s32.totalorder %s73, %s87
    %p89 = scmp.eq.s32.totalorder %s21, 0
    %p90 = por %p88, %p89
    %s92 = sadd.s32 %s91, 1
    %p95 = scmp.eq.s32.totalorder %s15, 1
    %p96 = scmp.ne.s32.totalorder %s91, %s93
    %p97 = scmp.eq.s32.totalorder %s15, 0
    %p98 = por %p96, %p97
    %p99 = scmp.ne.s32.totalorder %s91, %s93
    %p100 = scmp.eq.s32.totalorder %s20, 1
    %p101 = por %p99, %p100
    %p102 = scmp.ne.s32.totalorder %s93, %s94
    %p103 = scmp.eq.s32.totalorder %s20, 0
    %p104 = por %p102, %p103
    %p105 = scmp.ne.s32.totalorder %s93, %s94
    %p106 = scmp.eq.s32.totalorder %s21, 1
    %p107 = por %p105, %p106
    %p109 = scmp.ne.s32.totalorder %s94, %s108
    %p110 = scmp.eq.s32.totalorder %s21, 0
    %p111 = por %p109, %p110
    %s113 = sadd.s32 %s112, 1
    %p116 = scmp.eq.s32.totalorder %s15, 1
    %p117 = scmp.ne.s32.totalorder %s112, %s114
    %p118 = scmp.eq.s32.totalorder %s15, 0
    %p119 = por %p117, %p118
    %p120 = scmp.ne.s32.totalorder %s112, %s114
    %p121 = scmp.eq.s32.totalorder %s20, 1
    %p122 = por %p120, %p121
    %p123 = scmp.ne.s32.totalorder %s114, %s115
    %p124 = scmp.eq.s32.totalorder %s20, 0
    %p125 = por %p123, %p124
    %p126 = scmp.ne.s32.totalorder %s114, %s115
    %p127 = scmp.eq.s32.totalorder %s21, 1
    %p128 = por %p126, %p127
    %p130 = scmp.ne.s32.totalorder %s115, %s129
    %p131 = scmp.eq.s32.totalorder %s21, 0
    %p132 = por %p130, %p131
    %s134 = sadd.s32 %s133, 1
    %p137 = scmp.eq.s32.totalorder %s15, 1
    %p138 = scmp.ne.s32.totalorder %s133, %s135
    %p139 = scmp.eq.s32.totalorder %s15, 0
    %p140 = por %p138, %p139
    %p141 = scmp.ne.s32.totalorder %s133, %s135
    %p142 = scmp.eq.s32.totalorder %s20, 1
    %p143 = por %p141, %p142
    %p144 = scmp.ne.s32.totalorder %s135, %s136
    %p145 = scmp.eq.s32.totalorder %s20, 0
    %p146 = por %p144, %p145
    %p147 = scmp.ne.s32.totalorder %s135, %s136
    %p148 = scmp.eq.s32.totalorder %s21, 1
    %p149 = por %p147, %p148
    %p151 = scmp.ne.s32.totalorder %s136, %s150
    %p152 = scmp.eq.s32.totalorder %s21, 0
    %p153 = por %p151, %p152
    %s155 = sadd.s32 %s154, 1
    %p158 = scmp.eq.s32.totalorder %s15, 1
    %p159 = scmp.ne.s32.totalorder %s154, %s156
    %p160 = scmp.eq.s32.totalorder %s15, 0
    %p161 = por %p159, %p160
    %p162 = scmp.ne.s32.totalorder %s154, %s156
    %p163 = scmp.eq.s32.totalorder %s20, 1
    %p164 = por %p162, %p163
    %p165 = scmp.ne.s32.totalorder %s156, %s157
    %p166 = scmp.eq.s32.totalorder %s20, 0
    %p167 = por %p165, %p166
    %p168 = scmp.ne.s32.totalorder %s156, %s157
    %p169 = scmp.eq.s32.totalorder %s21, 1
    %p170 = por %p168, %p169
    %p172 = scmp.ne.s32.totalorder %s157, %s171
    %p173 = scmp.eq.s32.totalorder %s21, 0
    %p174 = por %p172, %p173
    %s176 = sadd.s32 %s175, 1
    %p179 = scmp.eq.s32.totalorder %s15, 1
    %p180 = scmp.ne.s32.totalorder %s175, %s177
    %p181 = scmp.eq.s32.totalorder %s15, 0
    %p182 = por %p180, %p181
    %p183 = scmp.ne.s32.totalorder %s175, %s177
    %p184 = scmp.eq.s32.totalorder %s20, 1
    %p185 = por %p183, %p184
    %p186 = scmp.ne.s32.totalorder %s177, %s178
    %p187 = scmp.eq.s32.totalorder %s20, 0
    %p188 = por %p186, %p187
    %p189 = scmp.ne.s32.totalorder %s177, %s178
    %p190 = scmp.eq.s32.totalorder %s21, 1
    %p191 = por %p189, %p190
    %p193 = scmp.ne.s32.totalorder %s178, %s192
    %p194 = scmp.eq.s32.totalorder %s21, 0
    %p195 = por %p193, %p194
    %s197 = sadd.s32 %s196, 1
    %p200 = scmp.eq.s32.totalorder %s15, 1
    %p201 = scmp.ne.s32.totalorder %s196, %s198
    %p202 = scmp.eq.s32.totalorder %s15, 0
    %p203 = por %p201, %p202
    %p204 = scmp.ne.s32.totalorder %s196, %s198
    %p205 = scmp.eq.s32.totalorder %s20, 1
    %p206 = por %p204, %p205
    %p207 = scmp.ne.s32.totalorder %s198, %s199
    %p208 = scmp.eq.s32.totalorder %s20, 0
    %p209 = por %p207, %p208
    %p210 = scmp.ne.s32.totalorder %s198, %s199
    %p211 = scmp.eq.s32.totalorder %s21, 1
    %p212 = por %p210, %p211
    %p214 = scmp.ne.s32.totalorder %s199, %s213
    %p215 = scmp.eq.s32.totalorder %s21, 0
    %p216 = por %p214, %p215
    %s217 = ssub.s32 %s15, %s22
    %p218 = scmp.eq.s32.totalorder %s217, 0
    %s220 = sadd.s32 %s219, 1
    %s221 = scalar_select %p218, %s219, %s220
    %p224 = pneg %p218
    %p225 = scmp.eq.s32.totalorder %s15, 1
    %p226 = por %p224, %p225
    %p227 = scmp.ne.s32.totalorder %s219, %s222
    %p228 = scmp.eq.s32.totalorder %s15, 0
    %p229 = por %p227, %p228
    %p230 = scmp.ne.s32.totalorder %s219, %s222
    %p231 = scmp.eq.s32.totalorder %s20, 1
    %p232 = por %p230, %p231
    %p233 = scmp.ne.s32.totalorder %s222, %s223
    %p234 = scmp.eq.s32.totalorder %s20, 0
    %p235 = por %p233, %p234
    %p236 = scmp.ne.s32.totalorder %s222, %s223
    %p237 = scmp.eq.s32.totalorder %s21, 1
    %p238 = por %p236, %p237
    %p240 = scmp.ne.s32.totalorder %s223, %s239
    %p241 = scmp.eq.s32.totalorder %s21, 0
    %p242 = por %p240, %p241
    %p243 = scmp.le.s32.totalorder 1, %s15
    %p244 = scmp.lt.s32.totalorder %s15, 3
    %p245 = pnand %p243, %p244
    %p246 = pneg %p245
    // Predicated region
    $region9: #{down_forward.1} parent=5 // pred_check
      _
    $region10: #{down_forward.1} parent=5 // pred_check_branch
      %248 = sbr.rel (%p245) target = $region12
    $region11: #{down_forward.1} parent=5 // pred_region
      %s249 = ssub.s32 %s15, 1
      // Predicated region
      $region13: #{down_forward.1} parent=11 // pred_check
        %p250 = pneg %p62
      $region14: #{down_forward.1} parent=11 // pred_check_branch
        %252 = sbr.rel (%p250) target = $region16
      $region15: #{down_forward.1} parent=11 // pred_region
        _
      $region16: #{down_forward.1} parent=11 // pred_fallthru
        _
      // Predicated region
      $region17: #{down_forward.1} parent=11 // pred_check
        %p253 = pneg %p83
      $region18: #{down_forward.1} parent=11 // pred_check_branch
        %255 = sbr.rel (%p253) target = $region20
      $region19: #{down_forward.1} parent=11 // pred_region
        _
      $region20: #{down_forward.1} parent=11 // pred_fallthru
        _
      // Predicated region
      $region21: #{down_forward.1} parent=11 // pred_check
        %p256 = pneg %p104
      $region22: #{down_forward.1} parent=11 // pred_check_branch
        %258 = sbr.rel (%p256) target = $region24
      $region23: #{down_forward.1} parent=11 // pred_region
        _
      $region24: #{down_forward.1} parent=11 // pred_fallthru
        _
      // Predicated region
      $region25: #{down_forward.1} parent=11 // pred_check
        %p259 = pneg %p125
      $region26: #{down_forward.1} parent=11 // pred_check_branch
        %261 = sbr.rel (%p259) target = $region28
      $region27: #{down_forward.1} parent=11 // pred_region
        _
      $region28: #{down_forward.1} parent=11 // pred_fallthru
        _
      // Predicated region
      $region29: #{down_forward.1} parent=11 // pred_check
        %p262 = pneg %p146
      $region30: #{down_forward.1} parent=11 // pred_check_branch
        %264 = sbr.rel (%p262) target = $region32
      $region31: #{down_forward.1} parent=11 // pred_region
        _
      $region32: #{down_forward.1} parent=11 // pred_fallthru
        _
      // Predicated region
      $region33: #{down_forward.1} parent=11 // pred_check
        %p265 = pneg %p167
      $region34: #{down_forward.1} parent=11 // pred_check_branch
        %267 = sbr.rel (%p265) target = $region36
      $region35: #{down_forward.1} parent=11 // pred_region
        _
      $region36: #{down_forward.1} parent=11 // pred_fallthru
        _
      // Predicated region
      $region37: #{down_forward.1} parent=11 // pred_check
        %p268 = pneg %p188
      $region38: #{down_forward.1} parent=11 // pred_check_branch
        %270 = sbr.rel (%p268) target = $region40
      $region39: #{down_forward.1} parent=11 // pred_region
        _
      $region40: #{down_forward.1} parent=11 // pred_fallthru
        _
      // Predicated region
      $region41: #{down_forward.1} parent=11 // pred_check
        %p271 = pneg %p209
      $region42: #{down_forward.1} parent=11 // pred_check_branch
        %273 = sbr.rel (%p271) target = $region44
      $region43: #{down_forward.1} parent=11 // pred_region
        _
      $region44: #{down_forward.1} parent=11 // pred_fallthru
        _
    $region12: #{down_forward.1} parent=5 // pred_fallthru
      _
    %p274 = scmp.lt.s32.totalorder %s15, 2
    // Predicated region
    $region45: #{down_forward.1} parent=5 // pred_check
      %p275 = pneg %p274
    $region46: #{down_forward.1} parent=5 // pred_check_branch
      %277 = sbr.rel (%p275) target = $region48
    $region47: #{down_forward.1} parent=5 // pred_region
      // Predicated region
      $region49: #{down_forward.1} parent=47 // pred_check
        %p278 = pneg %p35
      $region50: #{down_forward.1} parent=47 // pred_check_branch
        %280 = sbr.rel (%p278) target = $region52
      $region51: #{down_forward.1} parent=47 // pred_region
        %p281 = scmp.lt.s32.totalorder %s15, 1
        %s282 = scalar_select %p281, %s15, 1
        %s283 = smul.addr %s282, 2
        %s284 = smul.addr %s283, 4
        %s285 = scalar_lea.vmem %s0, %s284
      $region52: #{down_forward.1} parent=47 // pred_fallthru
        _
    $region48: #{down_forward.1} parent=5 // pred_fallthru
      _
    %p286 = scmp.le.s32.totalorder 1, %s15
    %p287 = scmp.lt.s32.totalorder %s15, 3
    %p288 = pnand %p286, %p287
    %p289 = pneg %p288
    // Predicated region
    $region53: #{down_forward.1} parent=5 // pred_check
      _
    $region54: #{down_forward.1} parent=5 // pred_check_branch
      %291 = sbr.rel (%p288) target = $region56
    $region55: #{down_forward.1} parent=5 // pred_region
      %s292 = ssub.s32 %s15, 1
      %p293 = scmp.lt.s32.totalorder %s20, 1
      %s294 = scalar_select %p293, %s20, 1
      %s295 = smul.addr %s294, 2
      %s296 = smul.addr %s295, 4
      %s297 = scalar_lea.vmem %s0, %s296
      %p298 = pneg %p41
      %p299 = pneg %p38
      %p300 = pneg %p62
      %p301 = pneg %p59
      %p302 = pneg %p83
      %p303 = pneg %p80
      %p304 = pneg %p104
      %p305 = pneg %p101
      %p306 = pneg %p125
      %p307 = pneg %p122
      %p308 = pneg %p146
      %p309 = pneg %p143
      %p310 = pneg %p167
      %p311 = pneg %p164
      %p312 = pneg %p188
      %p313 = pneg %p185
      %p314 = pneg %p209
      %p315 = pneg %p206
      %p316 = pneg %p235
      %p317 = pneg %p232
      %p318 = scmp.lt.s32.totalorder %s20, 1
      %s319 = scalar_select %p318, %s20, 1
      %s320 = smul.addr %s319, 8
      %s321 = scalar_lea.vmem %s9, %s320
      %p322 = scmp.lt.s32.totalorder %s20, 1
      %s323 = scalar_select %p322, %s20, 1
      %s324 = smul.addr %s323, 2
      %s325 = smul.addr %s324, 4
      %s326 = scalar_lea.vmem %s0, %s325
      %p327 = scmp.lt.s32.totalorder %s20, 1
      %s328 = scalar_select %p327, %s20, 1
      %s329 = smul.addr %s328, 8
      %s330 = scalar_lea.vmem %s9, %s329
      %vm332 = vcmask 1043456
      %vm333 = vcmask 179204
      %vm334 = vmor %vm333, %vm332
      %335 = vst.msk [vmem:[#allocation3] sm:$0xff] %vm334, 0.0
      %336 = vst [vmem:[#allocation4] sm:$0xff] 0.0
      %vm337 = vcmask 179200
      %338 = vst.msk [vmem:[#allocation4 + $0x8] sm:$0xff] %vm337, 0.0
      %339 = vst [vmem:[#allocation2] sm:$0xff] 0.0
      %vm340 = vcmask 257024
      %341 = vst.msk [vmem:[#allocation2 + $0x8] sm:$0xf] %vm340, 0.0
      %v342 = vld [vmem:[%s326] sm:$0xff]
      %344 = vrot.lane.b32.xlu0 %v342, 16
      %v345 = vpop.permute.xlu0 %344
      %v346 = vrot.slane %v345, 4
      %vm347 = vcmask 130048
      %v348 = vsel %vm347, %v346, %v345
      %vm351 = vcmask 1043584
      %vm352 = vcmask 1047556
      %vm353 = vmor %vm352, %vm351
      %354 = vst.msk [vmem:[#allocation2] sm:$0xff] %vm353, %v348
      %vm355 = vcmask 125952
      %356 = vst.msk [vmem:[#allocation2 + $0x8] sm:$0xf] %vm355, %v346
      %v357 = vld [vmem:[#allocation2] sm:$0xff]
      %v358 = vld [vmem:[#allocation2 + $0x8] sm:$0xf]
      %v359 = vld [vmem:[%s1] ss:$4 sm:$0x3]
      %vm360 = vcmp.gt.f32.partialorder %v359, 0.5
      %v361 = vsel %vm360, 1, 0
      %v362 = vperm.slane %v361, 0
      %v363 = vperm.slane %v361, 1
      %vm364 = vcmp.eq.s32.totalorder %v362, 1
      %vm365 = vcmp.eq.s32.totalorder %v363, 1
      %368 = vst [vmem:[#allocation1] ss:$2 sm:$0xff] %v357
      %s369 = scalar_lea.vmem [#allocation1], 16
      %370 = vst [vmem:[%s369] ss:$2 sm:$0xff] %v358
      %v371 = vld.sshfl [vmem:[#allocation1] sm:$0xff pattern:$0x75316420]
      %v372 = vld.sshfl [vmem:[#allocation1 + $0x8] sm:$0xff pattern:$0x75316420]
      %v373 = vld.sshfl [vmem:[#allocation1 + $0x10] sm:$0xff pattern:$0x75316420]
      %374 = vrot.lane.b32.xlu0 %v371, 113
      %v375 = vpop.permute.xlu0 %374
      %376 = vrot.lane.b32.xlu0 %v372, 113
      %v377 = vpop.permute.xlu0 %376
      %378 = vrot.lane.b32.xlu0 %v373, 113
      %v379 = vpop.permute.xlu0 %378
      %vm380 = vcmask 924672
      %v381 = vsel %vm380, %v375, %v377
      %v382 = vsel %vm380, %v377, %v379
      %v385 = vsel %vm364, %v381, -3e+38
      %v386 = vsel %vm365, %v382, -3e+38
      %v389 = vrot.slane %v386, 4
      %v390 = vsel %vm332, %v385, %v389
      %391 = vrot.lane.b32.xlu0 %v390, 16
      %v392 = vpop.permute.xlu0 %391
      %v393 = vrot.slane %v392, 4
      %v394 = vsel %vm347, %v393, %v392
      %v397 = vmax.f32 %v357, %v394
      %v398 = vmax.f32 %v358, %v393
      %v399 = vld [vmem:[#allocation2] sm:$0xff]
      %v400 = vld [vmem:[#allocation2 + $0x8] sm:$0xf]
      %s401 = scalar_lea.vmem %s1, 1
      %v402 = vld [vmem:[%s401] ss:$4 sm:$0x3]
      %vm403 = vcmp.gt.f32.partialorder %v402, 0.5
      %v404 = vsel %vm403, 1, 0
      %v405 = vperm.slane %v404, 0
      %v406 = vperm.slane %v404, 1
      %vm407 = vcmp.eq.s32.totalorder %v405, 1
      %vm408 = vcmp.eq.s32.totalorder %v406, 1
      %411 = vst [vmem:[#allocation1] ss:$2 sm:$0xff] %v399
      %s412 = scalar_lea.vmem [#allocation1], 16
      %413 = vst [vmem:[%s412] ss:$2 sm:$0xff] %v400
      %v414 = vld.sshfl [vmem:[#allocation1] sm:$0xff pattern:$0x75316420]
      %v415 = vld.sshfl [vmem:[#allocation1 + $0x8] sm:$0xff pattern:$0x75316420]
      %v416 = vld.sshfl [vmem:[#allocation1 + $0x10] sm:$0xff pattern:$0x75316420]
      %417 = vrot.lane.b32.xlu0 %v414, 111
      %v418 = vpop.permute.xlu0 %417
      %419 = vrot.lane.b32.xlu0 %v415, 111
      %v420 = vpop.permute.xlu0 %419
      %421 = vrot.lane.b32.xlu0 %v416, 111
      %v422 = vpop.permute.xlu0 %421
      %vm423 = vcmask 908288
      %v424 = vsel %vm423, %v418, %v420
      %v425 = vsel %vm423, %v420, %v422
      %v428 = vsel %vm407, %v424, -3e+38
      %v429 = vsel %vm408, %v425, -3e+38
      %v432 = vrot.slane %v429, 4
      %v433 = vsel %vm332, %v428, %v432
      %434 = vrot.lane.b32.xlu0 %v433, 16
      %v435 = vpop.permute.xlu0 %434
      %v436 = vrot.slane %v435, 4
      %v437 = vsel %vm347, %v436, %v435
      %v440 = vmax.f32 %v397, %v437
      %v441 = vmax.f32 %v398, %v436
      %442 = vst.msk [vmem:[#allocation2] sm:$0xff] %vm353, %v440
      %443 = vst.msk [vmem:[#allocation2 + $0x8] sm:$0xf] %vm355, %v441
      %v444 = vld [vmem:[#allocation2] sm:$0xff]
      %s445 = scalar_lea.vmem %s1, 2
      %v446 = vld [vmem:[%s445] ss:$4 sm:$0x3]
      %vm447 = vcmp.gt.f32.partialorder %v446, 0.5
      %v448 = vsel %vm447, 1, 0
      %v449 = vperm.slane %v448, 0
      %v450 = vperm.slane %v448, 1
      %vm451 = vcmp.eq.s32.totalorder %v449, 1
      %vm452 = vcmp.eq.s32.totalorder %v450, 1
      %454 = vst [vmem:[#allocation1] ss:$2 sm:$0xff] %v444
      %v455 = vld.sshfl [vmem:[#allocation1] sm:$0xff pattern:$0x75316420]
      %v456 = vld.sshfl [vmem:[#allocation1 + $0x8] sm:$0xff pattern:$0x75316420]
      %v459 = vsel %vm451, %v455, -3e+38
      %v460 = vsel %vm452, %v456, -3e+38
      %v463 = vrot.slane %v460, 4
      %v464 = vsel %vm332, %v459, %v463
      %465 = vrot.lane.b32.xlu0 %v464, 16
      %v466 = vpop.permute.xlu0 %465
      %v467 = vrot.slane %v466, 4
      %v468 = vsel %vm347, %v467, %v466
      %v471 = vmax.f32 %v440, %v468
      %v472 = vmax.f32 %v441, %v467
      %v473 = vld [vmem:[#allocation2] sm:$0xff]
      %v474 = vld [vmem:[#allocation2 + $0x8] sm:$0xf]
      %s475 = scalar_lea.vmem %s1, 3
      %v476 = vld [vmem:[%s475] ss:$4 sm:$0x3]
      %vm477 = vcmp.gt.f32.partialorder %v476, 0.5
      %v478 = vsel %vm477, 1, 0
      %v479 = vperm.slane %v478, 0
      %v480 = vperm.slane %v478, 1
      %vm481 = vcmp.eq.s32.totalorder %v479, 1
      %vm482 = vcmp.eq.s32.totalorder %v480, 1
      %485 = vst [vmem:[#allocation1] ss:$2 sm:$0xff] %v473
      %s486 = scalar_lea.vmem [#allocation1], 16
      %487 = vst [vmem:[%s486] ss:$2 sm:$0xff] %v474
      %v488 = vld.sshfl [vmem:[#allocation1] sm:$0xff pattern:$0x75316420]
      %v489 = vld.sshfl [vmem:[#allocation1 + $0x8] sm:$0xff pattern:$0x75316420]
      %v490 = vld.sshfl [vmem:[#allocation1 + $0x10] sm:$0xff pattern:$0x75316420]
      %491 = vrot.lane.b32.xlu0 %v488, 96
      %v492 = vpop.permute.xlu0 %491
      %493 = vrot.lane.b32.xlu0 %v489, 96
      %v494 = vpop.permute.xlu0 %493
      %495 = vrot.lane.b32.xlu0 %v490, 96
      %v496 = vpop.permute.xlu0 %495
      %vm497 = vcmask 785408
      %v498 = vsel %vm497, %v492, %v494
      %v499 = vsel %vm497, %v494, %v496
      %v502 = vsel %vm481, %v498, -3e+38
      %v503 = vsel %vm482, %v499, -3e+38
      %v506 = vrot.slane %v503, 4
      %v507 = vsel %vm332, %v502, %v506
      %508 = vrot.lane.b32.xlu0 %v507, 16
      %v509 = vpop.permute.xlu0 %508
      %v510 = vrot.slane %v509, 4
      %v511 = vsel %vm347, %v510, %v509
      %v514 = vmax.f32 %v471, %v511
      %v515 = vmax.f32 %v472, %v510
      %v516 = vld [vmem:[%s2] sm:$0xff]
      %v517 = vld [vmem:[%s2 + $0x8] sm:$0xff]
      %v518 = vld [vmem:[%s2 + $0x10] sm:$0xff]
      %v519 = vld [vmem:[%s2 + $0x18] sm:$0xff]
      %v520 = vld [vmem:[%s2 + $0x20] sm:$0xff]
      %v521 = vld [vmem:[%s2 + $0x28] sm:$0xff]
      %v522 = vld [vmem:[%s2 + $0x30] sm:$0xff]
      %v523 = vld [vmem:[%s2 + $0x38] sm:$0xff]
      %v524 = vld [vmem:[%s2 + $0x40] sm:$0xff]
      %v525 = vld [vmem:[%s2 + $0x48] sm:$0xff]
      %v526 = vld [vmem:[%s2 + $0x50] sm:$0xff]
      %v527 = vld [vmem:[%s2 + $0x58] sm:$0xff]
      %v528 = vld [vmem:[%s2 + $0x60] sm:$0xff]
      %v529 = vld [vmem:[%s2 + $0x68] sm:$0xff]
      %v530 = vld [vmem:[%s2 + $0x70] sm:$0xff]
      %v531 = vld [vmem:[%s2 + $0x78] sm:$0xff]
      %v532 = vld [vmem:[%s2 + $0x80] sm:$0xff]
      %v533 = vld [vmem:[%s2 + $0x88] sm:$0xff]
      %v534 = vld [vmem:[%s2 + $0x90] sm:$0xff]
      %v535 = vld [vmem:[%s2 + $0x98] sm:$0xff]
      %v536 = vld [vmem:[%s2 + $0xa0] sm:$0xff]
      %v537 = vld [vmem:[%s2 + $0xa8] sm:$0xff]
      %v538 = vld [vmem:[%s2 + $0xb0] sm:$0xff]
      %v539 = vld [vmem:[%s2 + $0xb8] sm:$0xff]
      %v540 = vld [vmem:[%s2 + $0xc0] sm:$0xff]
      %v541 = vld [vmem:[%s2 + $0xc8] sm:$0xff]
      %v542 = vld [vmem:[%s2 + $0xd0] sm:$0xff]
      %v543 = vld [vmem:[%s2 + $0xd8] sm:$0xff]
      %v544 = vld [vmem:[%s2 + $0xe0] sm:$0xff]
      %v545 = vld [vmem:[%s2 + $0xe8] sm:$0xff]
      %v546 = vld [vmem:[%s2 + $0xf0] sm:$0xff]
      %v547 = vld [vmem:[%s2 + $0xf8] sm:$0xff]
      %550 = vst [vmem:[#allocation1] ss:$2 sm:$0xff] %v514
      %s551 = scalar_lea.vmem [#allocation1], 16
      %552 = vst [vmem:[%s551] ss:$2 sm:$0xff] %v515
      %v553 = vld.sshfl [vmem:[#allocation1] sm:$0xff pattern:$0x75316420]
      %v554 = vld.sshfl [vmem:[#allocation1 + $0x8] sm:$0xff pattern:$0x75316420]
      %v555 = vld.sshfl [vmem:[#allocation1 + $0x10] sm:$0xff pattern:$0x75316420]
      %556 = vrot.lane.b32.xlu0 %v553, 112
      %v557 = vpop.permute.xlu0 %556
      %558 = vrot.lane.b32.xlu0 %v554, 112
      %v559 = vpop.permute.xlu0 %558
      %560 = vrot.lane.b32.xlu0 %v555, 112
      %v561 = vpop.permute.xlu0 %560
      %vm562 = vcmask 916480
      %v563 = vsel %vm562, %v557, %v559
      %v564 = vsel %vm562, %v559, %v561
      %567 = vmatpush.msra.mxu0 %v531
      %568 = vmatpush.msra.mxu0 %v530
      %569 = vmatpush.msra.mxu0 %v529
      %570 = vmatpush.msra.mxu0 %v528
      %571 = vmatpush.msra.mxu0 %v527
      %572 = vmatpush.msra.mxu0 %v526
      %573 = vmatpush.msra.mxu0 %v525
      %574 = vmatpush.msra.mxu0 %v524
      %575 = vmatpush.msra.mxu0 %v523
      %576 = vmatpush.msra.mxu0 %v522
      %577 = vmatpush.msra.mxu0 %v521
      %578 = vmatpush.msra.mxu0 %v520
      %579 = vmatpush.msra.mxu0 %v519
      %580 = vmatpush.msra.mxu0 %v518
      %581 = vmatpush.msra.mxu0 %v517
      %582 = vmatpush.msra.mxu0 %v516
      %583 = vmatmul.f32.gmra.mxu0 %v563
      %v584 = vpop.f32.mrf.mxu0
      %v585 = vadd.f32 0.0, %v584
      %586 = vdwg.mxu0
      %587 = vmatpush.msra.mxu0 %v547
      %588 = vmatpush.msra.mxu0 %v546
      %589 = vmatpush.msra.mxu0 %v545
      %590 = vmatpush.msra.mxu0 %v544
      %591 = vmatpush.msra.mxu0 %v543
      %592 = vmatpush.msra.mxu0 %v542
      %593 = vmatpush.msra.mxu0 %v541
      %594 = vmatpush.msra.mxu0 %v540
      %595 = vmatpush.msra.mxu0 %v539
      %596 = vmatpush.msra.mxu0 %v538
      %597 = vmatpush.msra.mxu0 %v537
      %598 = vmatpush.msra.mxu0 %v536
      %599 = vmatpush.msra.mxu0 %v535
      %600 = vmatpush.msra.mxu0 %v534
      %601 = vmatpush.msra.mxu0 %v533
      %602 = vmatpush.msra.mxu0 %v532
      %603 = vmatmul.f32.gmra.mxu0 %v564
      %v604 = vpop.f32.mrf.mxu0
      %v605 = vadd.f32 %v585, %v604
      %606 = vdwg.mxu0
      %608 = vrot.lane.b32.xlu0 %v605, 11
      %v609 = vpop.permute.xlu0 %608
      %v610 = vrot.slane %v609, 4
      %vm611 = vcmask 89088
      %v612 = vsel %vm611, %v610, %v609
      %vm614 = vcmask 1043544
      %vm615 = vcmask 89092
      %vm616 = vmor %vm615, %vm614
      %617 = vst.msk [vmem:[#allocation3] sm:$0xff] %vm616, %v612
      %v618 = vld [vmem:[#allocation3] sm:$0xf]
      %619 = vst [vmem:[#allocation5] sm:$0xf] %v618
      %v620 = vld [vmem:[#allocation3] sm:$0xff]
      %622 = vst [vmem:[#allocation1] ss:$2 sm:$0xff] %v620
      %v623 = vld.sshfl [vmem:[#allocation1] sm:$0xff pattern:$0x75316420]
      %v624 = vld.sshfl [vmem:[#allocation1 + $0x8] sm:$0xff pattern:$0x75316420]
      %625 = vrot.lane.b32.xlu0 %v623, 127
      %v626 = vpop.permute.xlu0 %625
      %627 = vrot.lane.b32.xlu0 %v624, 127
      %v628 = vpop.permute.xlu0 %627
      %vm629 = vcmask 1039360
      %v630 = vsel %vm629, %v626, %v628
      %632 = vst [vmem:[#allocation5 + $0x4] sm:$0xf] %v630
      %v633 = vld [vmem:[#allocation3] sm:$0xff]
      %635 = vst [vmem:[#allocation1] ss:$2 sm:$0xff] %v633
      %v636 = vld.sshfl [vmem:[#allocation1] sm:$0xff pattern:$0x75316420]
      %v637 = vld.sshfl [vmem:[#allocation1 + $0x8] sm:$0xff pattern:$0x75316420]
      %638 = vrot.lane.b32.xlu0 %v636, 126
      %v639 = vpop.permute.xlu0 %638
      %640 = vrot.lane.b32.xlu0 %v637, 126
      %v641 = vpop.permute.xlu0 %640
      %vm642 = vcmask 1031168
      %v643 = vsel %vm642, %v639, %v641
      %645 = vst [vmem:[#allocation5 + $0x8] sm:$0xf] %v643
      %v646 = vld [vmem:[#allocation3] sm:$0xff]
      %648 = vst [vmem:[#allocation1] ss:$2 sm:$0xff] %v646
      %v649 = vld.sshfl [vmem:[#allocation1] sm:$0xff pattern:$0x75316420]
      %v650 = vld.sshfl [vmem:[#allocation1 + $0x8] sm:$0xff pattern:$0x75316420]
      %651 = vrot.lane.b32.xlu0 %v649, 118
      %v652 = vpop.permute.xlu0 %651
      %653 = vrot.lane.b32.xlu0 %v650, 118
      %v654 = vpop.permute.xlu0 %653
      %vm655 = vcmask 965632
      %v656 = vsel %vm655, %v652, %v654
      %658 = vst [vmem:[#allocation5 + $0xc] sm:$0xf] %v656
      %v659 = vld [vmem:[#allocation3] sm:$0xff]
      %661 = vst [vmem:[#allocation1] ss:$2 sm:$0xff] %v659
      %v662 = vld.sshfl [vmem:[#allocation1] sm:$0xff pattern:$0x75316420]
      %v663 = vld.sshfl [vmem:[#allocation1 + $0x8] sm:$0xff pattern:$0x75316420]
      %664 = vrot.lane.b32.xlu0 %v662, 117
      %v665 = vpop.permute.xlu0 %664
      %666 = vrot.lane.b32.xlu0 %v663, 117
      %v667 = vpop.permute.xlu0 %666
      %vm668 = vcmask 957440
      %v669 = vsel %vm668, %v665, %v667
      %671 = vst [vmem:[#allocation5 + $0x10] sm:$0xf] %v669
      %v672 = vld [vmem:[#allocation3] sm:$0xff]
      %674 = vst [vmem:[#allocation1] ss:$2 sm:$0xff] %v672
      %v675 = vld.sshfl [vmem:[#allocation1] sm:$0xff pattern:$0x75316420]
      %v676 = vld.sshfl [vmem:[#allocation1 + $0x8] sm:$0xff pattern:$0x75316420]
      %677 = vrot.lane.b32.xlu0 %v675, 116
      %v678 = vpop.permute.xlu0 %677
      %679 = vrot.lane.b32.xlu0 %v676, 116
      %v680 = vpop.permute.xlu0 %679
      %vm681 = vcmask 949248
      %v682 = vsel %vm681, %v678, %v680
      %684 = vst [vmem:[#allocation5 + $0x14] sm:$0xf] %v682
      %v685 = vld [vmem:[#allocation3] sm:$0xff]
      %687 = vst [vmem:[#allocation1] ss:$2 sm:$0xff] %v685
      %v688 = vld.sshfl [vmem:[#allocation1] sm:$0xff pattern:$0x75316420]
      %v689 = vld.sshfl [vmem:[#allocation1 + $0x8] sm:$0xff pattern:$0x75316420]
      %690 = vrot.lane.b32.xlu0 %v688, 108
      %v691 = vpop.permute.xlu0 %690
      %692 = vrot.lane.b32.xlu0 %v689, 108
      %v693 = vpop.permute.xlu0 %692
      %vm694 = vcmask 883712
      %v695 = vsel %vm694, %v691, %v693
      %697 = vst [vmem:[#allocation5 + $0x18] sm:$0xf] %v695
      %v698 = vld [vmem:[#allocation3] sm:$0xff]
      %700 = vst [vmem:[#allocation1] ss:$2 sm:$0xff] %v698
      %v701 = vld.sshfl [vmem:[#allocation1] sm:$0xff pattern:$0x75316420]
      %v702 = vld.sshfl [vmem:[#allocation1 + $0x8] sm:$0xff pattern:$0x75316420]
      %703 = vrot.lane.b32.xlu0 %v701, 107
      %v704 = vpop.permute.xlu0 %703
      %705 = vrot.lane.b32.xlu0 %v702, 107
      %v706 = vpop.permute.xlu0 %705
      %vm707 = vcmask 875520
      %v708 = vsel %vm707, %v704, %v706
      %710 = vst [vmem:[#allocation5 + $0x1c] sm:$0xf] %v708
      %v711 = vld [vmem:[#allocation3] sm:$0xff]
      %713 = vst [vmem:[#allocation1] ss:$2 sm:$0xff] %v711
      %v714 = vld.sshfl [vmem:[#allocation1] sm:$0xff pattern:$0x75316420]
      %v715 = vld.sshfl [vmem:[#allocation1 + $0x8] sm:$0xff pattern:$0x75316420]
      %716 = vrot.lane.b32.xlu0 %v714, 106
      %v717 = vpop.permute.xlu0 %716
      %718 = vrot.lane.b32.xlu0 %v715, 106
      %v719 = vpop.permute.xlu0 %718
      %vm720 = vcmask 867328
      %v721 = vsel %vm720, %v717, %v719
      %723 = vst [vmem:[#allocation5 + $0x20] sm:$0xf] %v721
      %v724 = vld [vmem:[%s3] sm:$0xf]
      %v725 = vld [vmem:[#allocation5] sm:$0xff]
      %v726 = vld [vmem:[#allocation5 + $0x8] sm:$0xff]
      %v727 = vld [vmem:[#allocation5 + $0x10] sm:$0xff]
      %v728 = vld [vmem:[#allocation5 + $0x18] sm:$0xff]
      %v729 = vld [vmem:[#allocation5 + $0x20] sm:$0xf]
      %v730 = vpack.c.bf16 %v726, %v725
      %v731 = vpack.c.bf16 %v728, %v727
      %v732 = vpack.c.bf16 %v729, %v729
      %v733 = vld [vmem:[%s5] sm:$0x1]
      %vm734 = vcmp.gt.f32.partialorder %v733, 0.5
      %v735 = vld [vmem:[%s4] sm:$0xff]
      %737 = vset.pattern.permute.xlu0 0
      %738 = vperm.xlu0 %737, %v735
      %v739 = vpop.permute.xlu0 %738
      %vm741 = vcmask 293888
      %v743 = vsel %vm741, %v724, 0
      %vm745 = vcmask 1041408
      %v747 = vsel %vm745, %v732, 0
      %749 = vmatpush.bf16.msra.mxu0 0
      %750 = vmatpush.bf16.msra.mxu0 0
      %751 = vmatpush.bf16.msra.mxu0 0
      %752 = vmatpush.bf16.msra.mxu0 0
      %753 = vmatpush.bf16.msra.mxu0 0
      %754 = vmatpush.bf16.msra.mxu0 %v747
      %755 = vmatpush.bf16.msra.mxu0 %v731
      %756 = vmatpush.bf16.msra.mxu0 %v730
      %757 = vmatmul.bf16.gmra.mxu0 %v743
      %v758 = vpop.f32.mrf.mxu0
      %v759 = vadd.f32 %v739, %v758
      %v760 = vpop.f32.mrf.mxu0
      %761 = vdwg.mxu0
      %v762 = vmax.f32 %v759, 0.0
      %v763 = vsel %vm734, 1, 0
      %v764 = vperm.slane %v763, 0
      %vm765 = vcmp.eq.s32.totalorder %v764, 1
      %v766 = vsel %vm765, %v762, 0.0
      %768 = vrot.lane.b32.xlu0 %v766, 11
      %v769 = vpop.permute.xlu0 %768
      %vm771 = vcmask 1047640
      %772 = vst.msk [vmem:[#allocation4] sm:$0xff] %vm771, %v769
      %773 = vst.msk [vmem:[#allocation4 + $0x8] sm:$0xff] %vm611, %v769
      %v774 = vld [vmem:[#allocation4] sm:$0xff]
      %775 = vst [vmem:[#allocation6] sm:$0xff] %v774
      %v776 = vld [vmem:[#allocation4] sm:$0xff]
      %v777 = vld [vmem:[#allocation4 + $0x8] sm:$0xff]
      %780 = vrot.lane.b32.xlu0 %v776, 127
      %v781 = vpop.permute.xlu0 %780
      %782 = vrot.lane.b32.xlu0 %v777, 127
      %v783 = vpop.permute.xlu0 %782
      %v784 = vsel %vm629, %v781, %v783
      %786 = vst [vmem:[#allocation6 + $0x8] sm:$0xff] %v784
      %v787 = vld [vmem:[#allocation4] sm:$0xff]
      %v788 = vld [vmem:[#allocation4 + $0x8] sm:$0xff]
      %791 = vrot.lane.b32.xlu0 %v787, 126
      %v792 = vpop.permute.xlu0 %791
      %793 = vrot.lane.b32.xlu0 %v788, 126
      %v794 = vpop.permute.xlu0 %793
      %v795 = vsel %vm642, %v792, %v794
      %797 = vst [vmem:[#allocation6 + $0x10] sm:$0xff] %v795
      %v798 = vld [vmem:[#allocation4] sm:$0xff]
      %v799 = vld [vmem:[#allocation4 + $0x8] sm:$0xff]
      %802 = vrot.lane.b32.xlu0 %v798, 118
      %v803 = vpop.permute.xlu0 %802
      %804 = vrot.lane.b32.xlu0 %v799, 118
      %v805 = vpop.permute.xlu0 %804
      %v806 = vsel %vm655, %v803, %v805
      %808 = vst [vmem:[#allocation6 + $0x18] sm:$0xff] %v806
      %v809 = vld [vmem:[#allocation4] sm:$0xff]
      %v810 = vld [vmem:[#allocation4 + $0x8] sm:$0xff]
      %813 = vrot.lane.b32.xlu0 %v809, 117
      %v814 = vpop.permute.xlu0 %813
      %815 = vrot.lane.b32.xlu0 %v810, 117
      %v816 = vpop.permute.xlu0 %815
      %v817 = vsel %vm668, %v814, %v816
      %819 = vst [vmem:[#allocation6 + $0x20] sm:$0xff] %v817
      %v820 = vld [vmem:[#allocation4] sm:$0xff]
      %v821 = vld [vmem:[#allocation4 + $0x8] sm:$0xff]
      %824 = vrot.lane.b32.xlu0 %v820, 116
      %v825 = vpop.permute.xlu0 %824
      %826 = vrot.lane.b32.xlu0 %v821, 116
      %v827 = vpop.permute.xlu0 %826
      %v828 = vsel %vm681, %v825, %v827
      %830 = vst [vmem:[#allocation6 + $0x28] sm:$0xff] %v828
      %v831 = vld [vmem:[#allocation4] sm:$0xff]
      %v832 = vld [vmem:[#allocation4 + $0x8] sm:$0xff]
      %835 = vrot.lane.b32.xlu0 %v831, 108
      %v836 = vpop.permute.xlu0 %835
      %837 = vrot.lane.b32.xlu0 %v832, 108
      %v838 = vpop.permute.xlu0 %837
      %v839 = vsel %vm694, %v836, %v838
      %841 = vst [vmem:[#allocation6 + $0x30] sm:$0xff] %v839
      %v842 = vld [vmem:[#allocation4] sm:$0xff]
      %v843 = vld [vmem:[#allocation4 + $0x8] sm:$0xff]
      %846 = vrot.lane.b32.xlu0 %v842, 107
      %v847 = vpop.permute.xlu0 %846
      %848 = vrot.lane.b32.xlu0 %v843, 107
      %v849 = vpop.permute.xlu0 %848
      %v850 = vsel %vm707, %v847, %v849
      %852 = vst [vmem:[#allocation6 + $0x38] sm:$0xff] %v850
      %v853 = vld [vmem:[#allocation4] sm:$0xff]
      %v854 = vld [vmem:[#allocation4 + $0x8] sm:$0xff]
      %857 = vrot.lane.b32.xlu0 %v853, 106
      %v858 = vpop.permute.xlu0 %857
      %859 = vrot.lane.b32.xlu0 %v854, 106
      %v860 = vpop.permute.xlu0 %859
      %v861 = vsel %vm720, %v858, %v860
      %863 = vst [vmem:[#allocation6 + $0x40] sm:$0xff] %v861
      %v864 = vld [vmem:[%s6] sm:$0xf]
      %v865 = vld [vmem:[#allocation6] sm:$0xff]
      %v866 = vld [vmem:[#allocation6 + $0x8] sm:$0xff]
      %v867 = vld [vmem:[#allocation6 + $0x10] sm:$0xff]
      %v868 = vld [vmem:[#allocation6 + $0x18] sm:$0xff]
      %v869 = vld [vmem:[#allocation6 + $0x20] sm:$0xff]
      %v870 = vld [vmem:[#allocation6 + $0x28] sm:$0xff]
      %v871 = vld [vmem:[#allocation6 + $0x30] sm:$0xff]
      %v872 = vld [vmem:[#allocation6 + $0x38] sm:$0xff]
      %v873 = vld [vmem:[#allocation6 + $0x40] sm:$0xff]
      %v874 = vpack.c.bf16 %v866, %v865
      %v875 = vpack.c.bf16 %v868, %v867
      %v876 = vpack.c.bf16 %v870, %v869
      %v877 = vpack.c.bf16 %v872, %v871
      %v878 = vpack.c.bf16 %v873, %v873
      %vm879 = vcmask 588800
      %v881 = vsel %vm879, %v864, 0
      %v884 = vsel %vm332, %v878, 0
      %886 = vmatpush.bf16.msra.mxu0 0
      %887 = vmatpush.bf16.msra.mxu0 0
      %888 = vmatpush.bf16.msra.mxu0 0
      %889 = vmatpush.bf16.msra.mxu0 %v884
      %890 = vmatpush.bf16.msra.mxu0 %v877
      %891 = vmatpush.bf16.msra.mxu0 %v876
      %892 = vmatpush.bf16.msra.mxu0 %v875
      %893 = vmatpush.bf16.msra.mxu0 %v874
      %894 = vmatmul.bf16.gmra.mxu0 %v881
      %v895 = vpop.f32.mrf.mxu0
      %v896 = vadd.f32 0.0, %v895
      %v897 = vpop.f32.mrf.mxu0
      %898 = vdwg.mxu0
      %v899 = vld [vmem:[%s8] sm:$0xff]
      %v900 = vld [vmem:[%s8 + $0x8] sm:$0xff]
      %v901 = vld [vmem:[%s8 + $0x10] sm:$0xff]
      %v902 = vld [vmem:[%s8 + $0x18] sm:$0xff]
      %v903 = vld [vmem:[%s8 + $0x20] sm:$0xff]
      %v904 = vld [vmem:[%s8 + $0x28] sm:$0xff]
      %v905 = vld [vmem:[%s8 + $0x30] sm:$0xff]
      %v906 = vld [vmem:[%s8 + $0x38] sm:$0xff]
      %v907 = vld [vmem:[%s8 + $0x40] sm:$0xff]
      %v908 = vld [vmem:[%s8 + $0x48] sm:$0xff]
      %v909 = vld [vmem:[%s8 + $0x50] sm:$0xff]
      %v910 = vld [vmem:[%s8 + $0x58] sm:$0xff]
      %v911 = vld [vmem:[%s8 + $0x60] sm:$0xff]
      %v912 = vld [vmem:[%s8 + $0x68] sm:$0xff]
      %v913 = vld [vmem:[%s8 + $0x70] sm:$0xff]
      %v914 = vld [vmem:[%s8 + $0x78] sm:$0xff]
      %v915 = vld [vmem:[%s7] sm:$0xff]
      %917 = vset.pattern.permute.xlu0 0
      %918 = vperm.xlu0 %917, %v915
      %v919 = vpop.permute.xlu0 %918
      %921 = vmatpush.msra.mxu0 %v914
      %922 = vmatpush.msra.mxu0 %v913
      %923 = vmatpush.msra.mxu0 %v912
      %924 = vmatpush.msra.mxu0 %v911
      %925 = vmatpush.msra.mxu0 %v910
      %926 = vmatpush.msra.mxu0 %v909
      %927 = vmatpush.msra.mxu0 %v908
      %928 = vmatpush.msra.mxu0 %v907
      %929 = vmatpush.msra.mxu0 %v906
      %930 = vmatpush.msra.mxu0 %v905
      %931 = vmatpush.msra.mxu0 %v904
      %932 = vmatpush.msra.mxu0 %v903
      %933 = vmatpush.msra.mxu0 %v902
      %934 = vmatpush.msra.mxu0 %v901
      %935 = vmatpush.msra.mxu0 %v900
      %936 = vmatpush.msra.mxu0 %v899
      %937 = vmatmul.f32.gmra.mxu0 %v896
      %v938 = vpop.f32.mrf.mxu0
      %v939 = vadd.f32 %v919, %v938
      %940 = vdwg.mxu0
      %v941 = vmax.f32 %v939, 0.0
      %vm942 = vcmask 523264
      %943 = vst.msk [vmem:[%s330] sm:$0xff] %vm942, %v941
      %p944 = scmp.lt.s32.totalorder %s20, 1
      %s945 = scalar_select %p944, %s20, 1
      %s946 = smul.addr %s945, 8
      %s947 = scalar_lea.vmem %s9, %s946
      // Predicated region
      $region57: #{down_forward.1} parent=55 // pred_check
        %p948 = pneg %p232
      $region58: #{down_forward.1} parent=55 // pred_check_branch
        %950 = sbr.rel (%p948) target = $region60
      $region59: #{down_forward.1} parent=55 // pred_region
        _
      $region60: #{down_forward.1} parent=55 // pred_fallthru
        _
    $region56: #{down_forward.1} parent=5 // pred_fallthru
      _
    %p951 = scmp.le.s32.totalorder 2, %s15
    // Predicated region
    $region61: #{down_forward.1} parent=5 // pred_check
      %p952 = pneg %p951
    $region62: #{down_forward.1} parent=5 // pred_check_branch
      %954 = sbr.rel (%p952) target = $region64
    $region63: #{down_forward.1} parent=5 // pred_region
      %s955 = ssub.s32 %s15, 2
      // Predicated region
      $region65: #{down_forward.1} parent=63 // pred_check
        %p956 = pneg %p238
      $region66: #{down_forward.1} parent=63 // pred_check_branch
        %958 = sbr.rel (%p956) target = $region68
      $region67: #{down_forward.1} parent=63 // pred_region
        %p959 = scmp.lt.s32.totalorder %s21, 1
        %s960 = scalar_select %p959, %s21, 1
        %s961 = smul.addr %s960, 8
        %s962 = scalar_lea.vmem %s9, %s961
      $region68: #{down_forward.1} parent=63 // pred_fallthru
        _
    $region64: #{down_forward.1} parent=5 // pred_fallthru
      _
  $region6: #{down_forward.1} parent=0 // loop_footer
    %s19 = sadd.s32 1, %s15
  $region7: #{down_forward.1} parent=0 // loop_footer_branch
    %14 = sbr.rel target = $region3
  $region8: #{down_forward.1} parent=0 // loop_exit
    _

</llo_original>
